<compile_context>
chip_gen: v7x
topology: tpu7x:2x2x1
jax: 0.10.0
libtpu: 0.0.40
codegen_flags: <defaults>
</compile_context>

<pallas_src>
import functools
import math

import jax
import jax.numpy as jnp
import numpy as np
from jax.experimental import pallas as pl
from jax.experimental.pallas import tpu as pltpu

EPS = 1e-6


def get_dft_matrix(conv_dim: int, channels: int) -> jnp.ndarray:
    """DCT-II style matrix identical to the PyTorch get_dft_matrix."""
    dft = np.zeros((conv_dim, channels), dtype=np.float32)
    for i in range(conv_dim):
        for j in range(channels):
            v = math.cos(math.pi / channels * (i + 0.5) * j) / math.sqrt(channels)
            dft[i, j] = v * (math.sqrt(2) if j > 0 else 1.0)
    return jnp.asarray(dft)


def _apply_activation(x, name):
    if name == "relu":
        return jnp.maximum(x, 0.0)
    if name == "sigmoid":
        return jax.nn.sigmoid(x)
    if name == "tanh":
        return jnp.tanh(x)
    # TODO(synk): 'atanh' (learnable Atanh module) is not fused; 'none' falls through.
    return x


def _lane_pack_factor(f: int) -> int:
    # Smallest p (a power of two) such that (p * f) % 128 == 0.
    return 128 // math.gcd(128, f)


def _round_up(a: int, b: int) -> int:
    return ((a + b - 1) // b) * b


# ---------------------------------------------------------------------------
# Fully fused multi-layer decoder kernel
# ---------------------------------------------------------------------------
def _make_decoder_kernel(num_layers, has_add, round_input, hidden_act, final_act,
                         clamp_val, use_res):
    def kernel(*refs):
        refs = list(refs)
        o_ref = refs.pop()                       # single output is last
        it = iter(refs)
        x_ref = next(it)
        w_refs, a_refs = [], []
        for li in range(num_layers):
            w_refs.append(next(it))
            a_refs.append(next(it) if has_add[li] else None)
        res_ref = next(it) if use_res else None

        h = x_ref[...]
        if round_input:
            h = jnp.round(h)                     # StraightThrough fwd (ties-to-even)
        for li in range(num_layers):             # hidden activations never leave vregs
            h = jnp.dot(h, w_refs[li][...], preferred_element_type=jnp.float32)  # MXU
            if a_refs[li] is not None:
                h = h + a_refs[li][...]
            if li < num_layers - 1:
                h = _apply_activation(h, hidden_act)
        h = _apply_activation(h, final_act)
        if clamp_val > 0.0:
            h = jnp.clip(h, -clamp_val, clamp_val)
        if use_res:
            h = h + res_ref[...]                 # residual (decoded_att)
        o_ref[...] = h.astype(o_ref.dtype)

    return kernel


def fused_decoder_forward(x, ws, adds, res, *, p, round_input, hidden_activation,
                          final_activation, clamp_val, block_rows,
                          vmem_tile_budget):
    """Single pallas_call computing the whole decoder.

    x: (n, in_f) f32.  ws[l]: kron-packed (p*in_f_l, p*out_f_l) weights with 1/div
    (layer 0) and the per-layer column scale already folded in.  adds[l]: tiled
    (1, p*out_f_l) shift or None.  res: (n, out_f) residual or None.
    """
    n, in_f = x.shape
    num_layers = len(ws)
    in_p = ws[0].shape[0]
    out_p = ws[-1].shape[1]
    out_f = out_p // p
    assert in_p == p * in_f
    use_res = res is not None

    # --- lane packing: fold p rows into lanes (free row-major reshape) ----------
    # Zero-pad only when n is not a multiple of p (<= p-1 rows); the common case
    # has no wrapper pad / slice copies at all.  Ragged last *tiles* are handled by
    # Pallas' masked partial blocks below (rows are independent).
    n_p = _round_up(n, p) if p > 1 else n
    if n_p != n:
        x = jnp.pad(x, ((0, n_p - n), (0, 0)))
        if use_res:
            res = jnp.pad(res, ((0, n_p - n), (0, 0)))
    np_rows = n_p // p
    x_p = x.reshape(np_rows, in_p)
    res_p = res.reshape(np_rows, out_p) if use_res else None

    # --- row-tile selection ------------------------------------------------------
    inter_p = max(w.shape[1] for w in ws)        # widest intermediate (f32, in vregs/VMEM)
    w_bytes = 4 * sum(w.shape[0] * w.shape[1] for w in ws) \
        + 4 * sum(a.shape[1] for a in adds if a is not None)
    per_row = 4 * (2 * in_p + 2 * out_p + (2 * out_p if use_res else 0) + 2 * inter_p)
    cap = max(8, int((vmem_tile_budget - w_bytes) // per_row))
    bl_p = min(max(8, block_rows // max(p, 1)), cap)
    bl_p = max(8, (bl_p // 8) * 8)
    if np_rows < 8:
        bl_p = np_rows                           # single block == full (sub-sublane) extent
    else:
        bl_p = min(bl_p, (np_rows // 8) * 8)
        # Keep >= 2 (ideally >= 4) grid steps whenever the batch allows so that
        # v7x's two TensorCores engage and the input/output DMAs double-buffer.
        if np_rows >= 32:
            bl_p = min(bl_p, _round_up(pl.cdiv(np_rows, 4), 8))
        elif np_rows >= 16:
            bl_p = min(bl_p, _round_up(pl.cdiv(np_rows, 2), 8))
    grid = (pl.cdiv(np_rows, bl_p),)

    has_add = tuple(a is not None for a in adds)
    kernel = _make_decoder_kernel(num_layers, has_add, round_input,
                                  hidden_activation, final_activation,
                                  float(clamp_val), use_res)

    # --- specs / args (optional operands are specialized away) -------------------
    args = [x_p]
    in_specs = [pl.BlockSpec((bl_p, in_p), lambda i: (i, 0))]
    for w, a in zip(ws, adds):
        # Grid-invariant and tiny here.  If feature dims grow, use
        # pipeline_mode=pl.Buffered(1) (or scratch staging + a K/N grid axis) to
        # drop the dead second pipeline buffer and respect v7x's 64 MiB VMEM.
        args.append(w)
        in_specs.append(pl.BlockSpec(tuple(w.shape), lambda i: (0, 0)))
        if a is not None:
            args.append(a)
            in_specs.append(pl.BlockSpec(tuple(a.shape), lambda i: (0, 0)))
    if use_res:
        args.append(res_p)
        in_specs.append(pl.BlockSpec((bl_p, out_p), lambda i: (i, 0)))

    # Cost estimate: flops include the pack factor p (kron block-diagonal weight).
    flops = 2 * np_rows * sum(w.shape[0] * w.shape[1] for w in ws)
    transc = 0
    if final_activation in ("sigmoid", "tanh"):
        transc += np_rows * out_p
    if hidden_activation in ("sigmoid", "tanh"):
        transc += np_rows * sum(w.shape[1] for w in ws[:-1])
    bytes_accessed = 4 * (np_rows * (in_p + out_p * (2 if use_res else 1)) + w_bytes // 4)

    out_packed = pl.pallas_call(
        kernel,
        out_shape=jax.ShapeDtypeStruct((np_rows, out_p), x.dtype),
        grid_spec=pltpu.PrefetchScalarGridSpec(
            num_scalar_prefetch=0,
            grid=grid,
            in_specs=in_specs,
            out_specs=pl.BlockSpec((bl_p, out_p), lambda i: (i, 0)),
        ),
        compiler_params=pltpu.CompilerParams(
            dimension_semantics=("parallel",),
            vmem_limit_bytes=32 * 1024 * 1024,
        ),
        cost_estimate=pl.CostEstimate(
            flops=int(flops), transcendentals=int(transc),
            bytes_accessed=int(bytes_accessed)),
    )(*args)

    out = out_packed.reshape(n_p, out_f)
    return out[:n] if n_p != n else out


# ---------------------------------------------------------------------------
# LatentDecoderRes (forward only)
# ---------------------------------------------------------------------------
class LatentDecoderResPallas:
    """JAX/Pallas port of LatentDecoderRes.forward (residual latent decoder)."""

    def __init__(self, latent_dim, feature_dim, ldecode_matrix, use_shift,
                 latent_norm="none", num_layers_dec=0, hidden_dim_dec=0,
                 activation="relu", final_activation="none",
                 clamp_weights=0.0, ldec_std=1.0, key=None,
                 block_rows=8192, vmem_tile_budget=20 * 1024 * 1024):
        if key is None:
            key = jax.random.PRNGKey(0)
        if activation == "atanh" or final_activation == "atanh":
            # TODO(synk): learnable Atanh activation not implemented in the fused kernel.
            raise NotImplementedError("atanh activation not supported in Pallas port")
        latent_dim = feature_dim if latent_dim == 0 else latent_dim
        self.ldecode_matrix = ldecode_matrix
        self.channels = feature_dim
        self.latent_dim = latent_dim
        self.norm = latent_norm
        self.num_layers_dec = num_layers_dec
        self.activation = activation            # 'none'|'relu'|'sigmoid'|'tanh'
        self.final_activation = final_activation
        self.clamp_weights = clamp_weights
        self.use_shift = use_shift
        self.div = jnp.ones((latent_dim,), jnp.float32)
        self._div_trivial = True
        self._block_rows = block_rows
        self._vmem_tile_budget = vmem_tile_budget

        if num_layers_dec > 0:
            hd = feature_dim if hidden_dim_dec == 0 else hidden_dim_dec
            hidden = (hd,) * num_layers_dec
        else:
            hidden = ()

        use_dft = "dft" in ldecode_matrix
        dims, d_in = [], latent_dim
        for h in hidden:
            h = d_in if h == 0 else h
            dims.append((d_in, h))
            d_in = h
        dims.append((d_in, feature_dim))

        # reset_parameters('normal', ldec_std): scale ~ N(0, ldec_std), shift = 0.
        self.layers = []
        for fi, fo in dims:
            key, sk = jax.random.split(key)
            layer = {"in": fi, "out": fo, "use_dft": use_dft}
            if use_dft:
                layer["dft"] = get_dft_matrix(fi, fo)
                layer["scale"] = ldec_std * jax.random.normal(sk, (1, fo), jnp.float32)
            else:
                layer["dft"] = None
                layer["scale"] = ldec_std * jax.random.normal(sk, (fi, fo), jnp.float32)
            layer["shift"] = jnp.zeros((1, fo), jnp.float32) if use_shift else None
            self.layers.append(layer)

        # LatentDecoderRes state
        self.frame_idx = 1
        self.identity = False
        self.decoded_att = None
        self.mask = None  # TODO(synk): freeze_partial masked path not implemented.

        # Packed / jitted forward cache (built lazily; invalidated on param changes).
        self._packed_ws = None
        self._packed_adds = None
        self._p = 1
        self._fwd_fn = None

    # ---- LatentDecoder helpers ----------------------------------------------
    def _invalidate(self):
        self._packed_ws = None
        self._packed_adds = None
        self._fwd_fn = None

    def normalize(self, x):
        if self.norm == "min_max":
            div = jnp.max(jnp.abs(x), axis=0)
        elif self.norm == "mean_std":
            div = jnp.std(x, axis=0)
        else:
            return
        self.div = jnp.maximum(div, jnp.ones_like(div))
        self._div_trivial = False
        self._invalidate()

    def init_decoded(self, decoded_att):
        self.decoded_att = decoded_att

    # ---- packed-constant / jit preparation -----------------------------------
    def _prepare(self):
        if self._fwd_fn is not None:
            return
        feat_dims = [self.layers[0]["in"]] + [l["out"] for l in self.layers]
        pf = max(_lane_pack_factor(f) for f in feat_dims)
        # p == 1 fallback keeps narrow (masked) lanes — only hit for very large
        # feature dims; a K/N-tiled path would be needed there for full speed.
        p = pf if (pf > 1 and pf * max(feat_dims) <= 2048) else 1
        self._p = p

        inv_div = None if self._div_trivial else (1.0 / self.div).astype(jnp.float32)
        ws, adds = [], []
        for li, layer in enumerate(self.layers):
            # Fold the per-layer column scale (dft case) and 1/div (layer 0) into W.
            # Adds one f32 reassociation per product; verified against the reference
            # tolerance in __main__.
            if layer["use_dft"]:
                w = layer["dft"] * layer["scale"]
            else:
                w = layer["scale"]
            if li == 0 and inv_div is not None:
                w = w * inv_div[:, None]
            if p > 1:
                w = jnp.kron(jnp.eye(p, dtype=w.dtype), w)   # block-diagonal weight
            ws.append(w)
            if layer["shift"] is not None:
                a = layer["shift"]
                adds.append(jnp.tile(a, (1, p)) if p > 1 else a)
            else:
                adds.append(None)
        self._packed_ws = tuple(ws)
        self._packed_adds = tuple(adds)

        self._fwd_fn = jax.jit(functools.partial(
            fused_decoder_forward,
            p=p, round_input=True,
            hidden_activation=self.activation,
            final_activation=self.final_activation,
            clamp_val=float(self.clamp_weights),
            block_rows=self._block_rows,
            vmem_tile_budget=self._vmem_tile_budget))

    # ---- forward -------------------------------------------------------------
    def __call__(self, weight):
        if self.identity:
            return weight + self.decoded_att
        if self.frame_idx == 1:
            return weight
        if self.mask is not None:
            # TODO(synk): freeze_partial masked path not implemented.
            raise NotImplementedError("masked (freeze_partial) path not supported")
        self._prepare()
        return self._fwd_fn(weight, self._packed_ws, self._packed_adds,
                            self.decoded_att)

    # ---- pure-JAX reference (mirrors the PyTorch forward, unfolded params) ----
    def reference(self, weight):
        if self.identity:
            return weight + self.decoded_att
        if self.frame_idx == 1:
            return weight
        x = jnp.round(weight) / self.div
        n_layers = len(self.layers)
        for li, layer in enumerate(self.layers):
            shift = layer["shift"] if layer["shift"] is not None else 0.0
            if layer["use_dft"]:
                x = jnp.matmul(x, layer["dft"]) * layer["scale"] + shift
            else:
                x = jnp.matmul(x, layer["scale"]) + shift
            if li < n_layers - 1:
                x = _apply_activation(x, self.activation)
        x = _apply_activation(x, self.final_activation)
        if self.clamp_weights > 0.0:
            x = jnp.clip(x, -self.clamp_weights, self.clamp_weights)
        return x + self.decoded_att


if __name__ == "__main__":
    key = jax.random.PRNGKey(0)
    kx, ka, k1, k2, k3, ks, kr, kq = jax.random.split(key, 8)

    batch, latent_dim, feature_dim = 200, 16, 32
    x = 2.0 * jax.random.normal(kx, (batch, latent_dim), jnp.float32)
    decoded_att = jax.random.normal(ka, (batch, feature_dim), jnp.float32)

    # 1) DFT variant: bias, min_max norm, tanh final activation, clamp, residual.
    dec_dft = LatentDecoderResPallas(
        latent_dim=latent_dim, feature_dim=feature_dim,
        ldecode_matrix="dft_fixed", use_shift=True, latent_norm="min_max",
        final_activation="tanh", clamp_weights=0.9, ldec_std=1.0, key=k1)
    dec_dft.normalize(x)
    dec_dft.layers[0]["shift"] = 0.1 * jax.random.normal(ks, (1, feature_dim), jnp.float32)
    dec_dft.init_decoded(decoded_att)
    dec_dft.frame_idx = 2
    out1 = jax.block_until_ready(dec_dft(x))
    ref1 = dec_dft.reference(x)
    assert out1.shape == (batch, feature_dim)
    np.testing.assert_allclose(np.asarray(out1), np.asarray(ref1), rtol=1e-5, atol=1e-4)

    # 2) Plain learnable matrix: no bias, no final activation, residual only.
    dec_lin = LatentDecoderResPallas(
        latent_dim=latent_dim, feature_dim=feature_dim,
        ldecode_matrix="learned", use_shift=False, latent_norm="none",
        final_activation="none", clamp_weights=0.0, ldec_std=0.5, key=k2)
    dec_lin.init_decoded(decoded_att)
    dec_lin.frame_idx = 2
    out2 = jax.block_until_ready(dec_lin(x))
    ref2 = dec_lin.reference(x)
    np.testing.assert_allclose(np.asarray(out2), np.asarray(ref2), rtol=1e-5, atol=1e-4)

    # 3) Multi-layer decoder (fully fused in ONE pallas_call): hidden ReLU, DFT,
    #    sigmoid final activation, residual.
    dec_mlp = LatentDecoderResPallas(
        latent_dim=latent_dim, feature_dim=feature_dim,
        ldecode_matrix="dft", use_shift=True, latent_norm="min_max",
        num_layers_dec=1, hidden_dim_dec=32, activation="relu",
        final_activation="sigmoid", clamp_weights=0.0, ldec_std=1.0, key=k3)
    dec_mlp.normalize(x)
    dec_mlp.init_decoded(decoded_att)
    dec_mlp.frame_idx = 3
    out3 = jax.block_until_ready(dec_mlp(x))
    ref3 = dec_mlp.reference(x)
    np.testing.assert_allclose(np.asarray(out3), np.asarray(ref3), rtol=1e-5, atol=1e-4)

    # 4) Ragged batch (n % pack_factor != 0) exercises the tiny zero-pad path.
    xr = 2.0 * jax.random.normal(kr, (57, latent_dim), jnp.float32)
    attr = jax.random.normal(kq, (57, feature_dim), jnp.float32)
    dec_lin.init_decoded(attr)
    out4 = jax.block_until_ready(dec_lin(xr))
    ref4 = dec_lin.reference(xr)
    np.testing.assert_allclose(np.asarray(out4), np.asarray(ref4), rtol=1e-5, atol=1e-4)

    # 5) Trivial module paths (no kernel): first frame and identity mode.
    dec_dft.frame_idx = 1
    np.testing.assert_allclose(np.asarray(dec_dft(x)), np.asarray(x))
    dec_dft.identity = True
    y = jax.random.normal(kx, (batch, feature_dim), jnp.float32)
    np.testing.assert_allclose(np.asarray(dec_dft(y)), np.asarray(y + decoded_att))

    print("KERNEL_OK")
</pallas_src>

<mosaic_0001>
module attributes {stable_mosaic.version = 11 : i64} {
  func.func @kernel(%arg0: i32, %arg1: memref<16x128xf32, #tpu.memory_space<vmem>>, %arg2: memref<128x256xf32, #tpu.memory_space<vmem>>, %arg3: memref<1x256xf32, #tpu.memory_space<vmem>>, %arg4: memref<16x256xf32, #tpu.memory_space<vmem>>, %arg5: memref<16x256xf32, #tpu.memory_space<vmem>>) attributes {dimension_semantics = [#tpu.dimension_semantics<parallel>], iteration_bounds = array<i64: 2>, scalar_prefetch = 0 : i64, scratch_operands = 0 : i64, tpu.core_type = #tpu.core_type<tc>, window_params = [{transform_indices = @transform_0, window_bounds = array<i64: 16, 128>}, {pipeline_mode = #tpu.pipeline_mode<synchronous>, transform_indices = @transform_1, window_bounds = array<i64: 128, 256>}, {pipeline_mode = #tpu.pipeline_mode<synchronous>, transform_indices = @transform_2, window_bounds = array<i64: 1, 256>}, {transform_indices = @transform_3, window_bounds = array<i64: 16, 256>}, {transform_indices = @transform_4, window_bounds = array<i64: 16, 256>}]} {
    %c0 = arith.constant 0 : index
    %c0_0 = arith.constant 0 : index
    %0 = vector.load %arg1[%c0, %c0_0] : memref<16x128xf32, #tpu.memory_space<vmem>>, vector<16x128xf32>
    %1 = math.roundeven %0 : vector<16x128xf32>
    %c0_1 = arith.constant 0 : index
    %c0_2 = arith.constant 0 : index
    %2 = vector.load %arg2[%c0_1, %c0_2] : memref<128x256xf32, #tpu.memory_space<vmem>>, vector<128x256xf32>
    %cst = arith.constant dense<0.000000e+00> : vector<16x256xf32>
    %3 = tpu.matmul %1, %2, %cst {dimension_numbers = #tpu.dot_dimension_numbers<[1], [0], [0], [1], [0, 0, 1, 1], [], []>} : vector<16x128xf32>, vector<128x256xf32>, vector<16x256xf32> -> vector<16x256xf32>
    %c0_3 = arith.constant 0 : index
    %c0_4 = arith.constant 0 : index
    %4 = vector.load %arg3[%c0_3, %c0_4] : memref<1x256xf32, #tpu.memory_space<vmem>>, vector<1x256xf32>
    %5 = vector.broadcast %4 : vector<1x256xf32> to vector<16x256xf32>
    %6 = arith.addf %3, %5 : vector<16x256xf32>
    %7 = math.tanh %6 : vector<16x256xf32>
    %cst_5 = arith.constant -0.899999976 : f32
    %cst_6 = arith.constant 0.899999976 : f32
    %8 = vector.broadcast %cst_5 : f32 to vector<16x256xf32>
    %9 = arith.maximumf %8, %7 : vector<16x256xf32>
    %10 = vector.broadcast %cst_6 : f32 to vector<16x256xf32>
    %11 = arith.minimumf %10, %9 : vector<16x256xf32>
    %c0_7 = arith.constant 0 : index
    %c0_8 = arith.constant 0 : index
    %12 = vector.load %arg4[%c0_7, %c0_8] : memref<16x256xf32, #tpu.memory_space<vmem>>, vector<16x256xf32>
    %13 = arith.addf %11, %12 : vector<16x256xf32>
    %c0_9 = arith.constant 0 : index
    %c0_10 = arith.constant 0 : index
    %14 = vector.load %arg5[%c0_9, %c0_10] : memref<16x256xf32, #tpu.memory_space<vmem>>, vector<16x256xf32>
    tpu.vector_store %arg5[%c0_9, %c0_10], %13 {strides = array<i32>} : memref<16x256xf32, #tpu.memory_space<vmem>>, vector<16x256xf32>,
    return
  }
  func.func @transform_0(%arg0: i32) -> (i32, i32) {
    %c0_i32 = arith.constant 0 : i32
    %c0_i32_0 = arith.constant 0 : i32
    return %arg0, %c0_i32 : i32, i32
  }
  func.func @transform_1(%arg0: i32) -> (i32, i32) {
    %c0_i32 = arith.constant 0 : i32
    %c0_i32_0 = arith.constant 0 : i32
    %c0_i32_1 = arith.constant 0 : i32
    return %c0_i32, %c0_i32_0 : i32, i32
  }
  func.func @transform_2(%arg0: i32) -> (i32, i32) {
    %c0_i32 = arith.constant 0 : i32
    %c0_i32_0 = arith.constant 0 : i32
    %c0_i32_1 = arith.constant 0 : i32
    return %c0_i32, %c0_i32_0 : i32, i32
  }
  func.func @transform_3(%arg0: i32) -> (i32, i32) {
    %c0_i32 = arith.constant 0 : i32
    %c0_i32_0 = arith.constant 0 : i32
    return %arg0, %c0_i32 : i32, i32
  }
  func.func @transform_4(%arg0: i32) -> (i32, i32) {
    %c0_i32 = arith.constant 0 : i32
    %c0_i32_0 = arith.constant 0 : i32
    return %arg0, %c0_i32 : i32, i32
  }
}

</mosaic_0001>

<llo_original>
// kernel: fused_decoder_forward.1
$region0: #{fused_decoder_forward.1}
  #allocation0 [shape = 'u32[]', space=smem, size = 0x4, offset = 0x4, fixed_abs, tag = 'smem constant byte address 0x4 - core index']
  #allocation1 [shape = 'u32[144,128]{1,0:T(1,128)}', space=vmem, size = 0x12000, scoped, tag = 'internal scratch']
  %s0 = inlined_call_operand.vmem [shape: f32[25,128], index: 0, kind: input, shape index: {}]
  %s1 = inlined_call_operand.vmem [shape: f32[128,256], index: 1, kind: input, shape index: {}]
  %s2 = inlined_call_operand.vmem [shape: f32[1,256], index: 2, kind: input, shape index: {}]
  %s3 = inlined_call_operand.vmem [shape: f32[25,256], index: 3, kind: input, shape index: {}]
  %s4 = inlined_call_operand.vmem [shape: f32[25,256], index: 4, kind: output, shape index: {}]
  %s5 = sld [smem:[#allocation0]]
  $region49: #{fused_decoder_forward.1} parent=0
    _
  %s7 = ssub.s32 1, %s5
  %s8 = scalar_select 0, %s7, %s5
  loop: start=0, step=1, limit=4
  $region2: #{fused_decoder_forward.1} parent=0 // loop_pre_header
    _
  $region3: #{fused_decoder_forward.1} parent=0 // loop_header
    %s10 = sphi 0, %s14
    %p11 = scmp.ge.s32.totalorder %s10, 4
    %s20 = sphi 0, %s22
    %s23 = sphi 0, %s20
    %s24 = sphi 0, %s23
    %s40 = sphi 0, %s24
    %s44 = sphi 0, %s44
    %s46 = sphi 0, %s44
    %s47 = sphi 0, %s46
    %s61 = sphi 0, %s47
    %s65 = sphi 0, %s65
    %s67 = sphi 0, %s65
    %s68 = sphi 0, %s67
    %s82 = sphi 0, %s68
    %s88 = sphi 0, %s90
    %s91 = sphi 0, %s88
    %s92 = sphi 0, %s91
    %s108 = sphi 0, %s92
    %s114 = sphi 0, %s116
    %s117 = sphi 0, %s114
    %s118 = sphi 0, %s117
    %s134 = sphi 0, %s118
  $region4: #{fused_decoder_forward.1} parent=0 // loop_header_branch
    %13 = sbr.rel (%p11) target = $region8
  $region5: #{fused_decoder_forward.1} parent=0 // loop_body
    %s15 = ssub.s32 %s10, 1
    %s16 = ssub.s32 %s10, 2
    %s17 = sadd.s32 %s10, 1
    %s18 = ssub.s32 %s10, %s17
    %p19 = scmp.eq.s32.totalorder %s18, 0
    %s21 = sadd.s32 %s20, 1
    %s22 = scalar_select %p19, %s20, %s21
    %p25 = pneg %p19
    %p26 = scmp.eq.s32.totalorder %s10, 1
    %p27 = por %p25, %p26
    %p28 = scmp.ne.s32.totalorder %s20, %s23
    %p29 = scmp.eq.s32.totalorder %s10, 0
    %p30 = por %p28, %p29
    %p31 = scmp.ne.s32.totalorder %s20, %s23
    %p32 = scmp.eq.s32.totalorder %s15, 1
    %p33 = por %p31, %p32
    %p34 = scmp.ne.s32.totalorder %s23, %s24
    %p35 = scmp.eq.s32.totalorder %s15, 0
    %p36 = por %p34, %p35
    %p37 = scmp.ne.s32.totalorder %s23, %s24
    %p38 = scmp.eq.s32.totalorder %s16, 1
    %p39 = por %p37, %p38
    %p41 = scmp.ne.s32.totalorder %s24, %s40
    %p42 = scmp.eq.s32.totalorder %s16, 0
    %p43 = por %p41, %p42
    %s45 = sadd.s32 %s44, 1
    %p48 = scmp.eq.s32.totalorder %s10, 1
    %p49 = scmp.ne.s32.totalorder %s44, %s46
    %p50 = scmp.eq.s32.totalorder %s10, 0
    %p51 = por %p49, %p50
    %p52 = scmp.ne.s32.totalorder %s44, %s46
    %p53 = scmp.eq.s32.totalorder %s15, 1
    %p54 = por %p52, %p53
    %p55 = scmp.ne.s32.totalorder %s46, %s47
    %p56 = scmp.eq.s32.totalorder %s15, 0
    %p57 = por %p55, %p56
    %p58 = scmp.ne.s32.totalorder %s46, %s47
    %p59 = scmp.eq.s32.totalorder %s16, 1
    %p60 = por %p58, %p59
    %p62 = scmp.ne.s32.totalorder %s47, %s61
    %p63 = scmp.eq.s32.totalorder %s16, 0
    %p64 = por %p62, %p63
    %s66 = sadd.s32 %s65, 1
    %p69 = scmp.eq.s32.totalorder %s10, 1
    %p70 = scmp.ne.s32.totalorder %s65, %s67
    %p71 = scmp.eq.s32.totalorder %s10, 0
    %p72 = por %p70, %p71
    %p73 = scmp.ne.s32.totalorder %s65, %s67
    %p74 = scmp.eq.s32.totalorder %s15, 1
    %p75 = por %p73, %p74
    %p76 = scmp.ne.s32.totalorder %s67, %s68
    %p77 = scmp.eq.s32.totalorder %s15, 0
    %p78 = por %p76, %p77
    %p79 = scmp.ne.s32.totalorder %s67, %s68
    %p80 = scmp.eq.s32.totalorder %s16, 1
    %p81 = por %p79, %p80
    %p83 = scmp.ne.s32.totalorder %s68, %s82
    %p84 = scmp.eq.s32.totalorder %s16, 0
    %p85 = por %p83, %p84
    %s86 = ssub.s32 %s10, %s17
    %p87 = scmp.eq.s32.totalorder %s86, 0
    %s89 = sadd.s32 %s88, 1
    %s90 = scalar_select %p87, %s88, %s89
    %p93 = pneg %p87
    %p94 = scmp.eq.s32.totalorder %s10, 1
    %p95 = por %p93, %p94
    %p96 = scmp.ne.s32.totalorder %s88, %s91
    %p97 = scmp.eq.s32.totalorder %s10, 0
    %p98 = por %p96, %p97
    %p99 = scmp.ne.s32.totalorder %s88, %s91
    %p100 = scmp.eq.s32.totalorder %s15, 1
    %p101 = por %p99, %p100
    %p102 = scmp.ne.s32.totalorder %s91, %s92
    %p103 = scmp.eq.s32.totalorder %s15, 0
    %p104 = por %p102, %p103
    %p105 = scmp.ne.s32.totalorder %s91, %s92
    %p106 = scmp.eq.s32.totalorder %s16, 1
    %p107 = por %p105, %p106
    %p109 = scmp.ne.s32.totalorder %s92, %s108
    %p110 = scmp.eq.s32.totalorder %s16, 0
    %p111 = por %p109, %p110
    %s112 = ssub.s32 %s10, %s17
    %p113 = scmp.eq.s32.totalorder %s112, 0
    %s115 = sadd.s32 %s114, 1
    %s116 = scalar_select %p113, %s114, %s115
    %p119 = pneg %p113
    %p120 = scmp.eq.s32.totalorder %s10, 1
    %p121 = por %p119, %p120
    %p122 = scmp.ne.s32.totalorder %s114, %s117
    %p123 = scmp.eq.s32.totalorder %s10, 0
    %p124 = por %p122, %p123
    %p125 = scmp.ne.s32.totalorder %s114, %s117
    %p126 = scmp.eq.s32.totalorder %s15, 1
    %p127 = por %p125, %p126
    %p128 = scmp.ne.s32.totalorder %s117, %s118
    %p129 = scmp.eq.s32.totalorder %s15, 0
    %p130 = por %p128, %p129
    %p131 = scmp.ne.s32.totalorder %s117, %s118
    %p132 = scmp.eq.s32.totalorder %s16, 1
    %p133 = por %p131, %p132
    %p135 = scmp.ne.s32.totalorder %s118, %s134
    %p136 = scmp.eq.s32.totalorder %s16, 0
    %p137 = por %p135, %p136
    %p138 = scmp.le.s32.totalorder 1, %s10
    %p139 = scmp.lt.s32.totalorder %s10, 3
    %p140 = pnand %p138, %p139
    %p141 = pneg %p140
    // Predicated region
    $region9: #{fused_decoder_forward.1} parent=5 // pred_check
      _
    $region10: #{fused_decoder_forward.1} parent=5 // pred_check_branch
      %143 = sbr.rel (%p140) target = $region12
    $region11: #{fused_decoder_forward.1} parent=5 // pred_region
      %s144 = ssub.s32 %s10, 1
      // Predicated region
      $region13: #{fused_decoder_forward.1} parent=11 // pred_check
        %p145 = pneg %p57
      $region14: #{fused_decoder_forward.1} parent=11 // pred_check_branch
        %147 = sbr.rel (%p145) target = $region16
      $region15: #{fused_decoder_forward.1} parent=11 // pred_region
        _
      $region16: #{fused_decoder_forward.1} parent=11 // pred_fallthru
        _
      // Predicated region
      $region17: #{fused_decoder_forward.1} parent=11 // pred_check
        %p148 = pneg %p78
      $region18: #{fused_decoder_forward.1} parent=11 // pred_check_branch
        %150 = sbr.rel (%p148) target = $region20
      $region19: #{fused_decoder_forward.1} parent=11 // pred_region
        _
      $region20: #{fused_decoder_forward.1} parent=11 // pred_fallthru
        _
    $region12: #{fused_decoder_forward.1} parent=5 // pred_fallthru
      _
    %p151 = scmp.lt.s32.totalorder %s10, 2
    // Predicated region
    $region21: #{fused_decoder_forward.1} parent=5 // pred_check
      %p152 = pneg %p151
    $region22: #{fused_decoder_forward.1} parent=5 // pred_check_branch
      %154 = sbr.rel (%p152) target = $region24
    $region23: #{fused_decoder_forward.1} parent=5 // pred_region
      // Predicated region
      $region25: #{fused_decoder_forward.1} parent=23 // pred_check
        %p155 = pneg %p30
      $region26: #{fused_decoder_forward.1} parent=23 // pred_check_branch
        %157 = sbr.rel (%p155) target = $region28
      $region27: #{fused_decoder_forward.1} parent=23 // pred_region
        %s158 = smul.u32 2, %s10
        %p159 = scmp.lt.s32.totalorder %s158, 3
        %s160 = scalar_select %p159, %s158, 3
        %s161 = smul.addr %s160, 8
        %s162 = scalar_lea.vmem %s0, %s161
        %s163 = smul.u32 2, %s10
      $region28: #{fused_decoder_forward.1} parent=23 // pred_fallthru
        _
      // Predicated region
      $region29: #{fused_decoder_forward.1} parent=23 // pred_check
        %p164 = pneg %p98
      $region30: #{fused_decoder_forward.1} parent=23 // pred_check_branch
        %166 = sbr.rel (%p164) target = $region32
      $region31: #{fused_decoder_forward.1} parent=23 // pred_region
        %s167 = smul.u32 2, %s10
        %p168 = scmp.lt.s32.totalorder %s167, 3
        %s169 = scalar_select %p168, %s167, 3
        %s170 = smul.addr %s169, 2
        %s171 = smul.addr %s170, 8
        %s172 = scalar_lea.vmem %s3, %s171
        %s173 = smul.u32 2, %s10
      $region32: #{fused_decoder_forward.1} parent=23 // pred_fallthru
        _
    $region24: #{fused_decoder_forward.1} parent=5 // pred_fallthru
      _
    %p174 = scmp.le.s32.totalorder 1, %s10
    %p175 = scmp.lt.s32.totalorder %s10, 3
    %p176 = pnand %p174, %p175
    %p177 = pneg %p176
    // Predicated region
    $region33: #{fused_decoder_forward.1} parent=5 // pred_check
      _
    $region34: #{fused_decoder_forward.1} parent=5 // pred_check_branch
      %179 = sbr.rel (%p176) target = $region36
    $region35: #{fused_decoder_forward.1} parent=5 // pred_region
      %s180 = ssub.s32 %s10, 1
      %s181 = smul.u32 2, %s15
      %p182 = scmp.lt.s32.totalorder %s181, 3
      %s183 = scalar_select %p182, %s181, 3
      %s184 = smul.addr %s183, 8
      %s185 = scalar_lea.vmem %s0, %s184
      %p186 = pneg %p36
      %p187 = pneg %p33
      %p188 = pneg %p57
      %p189 = pneg %p54
      %p190 = pneg %p78
      %p191 = pneg %p75
      %s192 = smul.u32 2, %s15
      %p193 = scmp.lt.s32.totalorder %s192, 3
      %s194 = scalar_select %p193, %s192, 3
      %s195 = smul.addr %s194, 2
      %s196 = smul.addr %s195, 8
      %s197 = scalar_lea.vmem %s3, %s196
      %p198 = pneg %p104
      %p199 = pneg %p101
      %p200 = pneg %p130
      %p201 = pneg %p127
      %s202 = smul.u32 2, %s15
      %p203 = scmp.lt.s32.totalorder %s202, 3
      %s204 = scalar_select %p203, %s202, 3
      %s205 = smul.addr %s204, 2
      %s206 = smul.addr %s205, 8
      %s207 = scalar_lea.vmem %s4, %s206
      %s208 = smul.u32 2, %s15
      %p209 = scmp.lt.s32.totalorder %s208, 3
      %s210 = scalar_select %p209, %s208, 3
      %s211 = smul.addr %s210, 8
      %s212 = scalar_lea.vmem %s0, %s211
      %s213 = smul.u32 2, %s15
      %s214 = smul.u32 2, %s15
      %p215 = scmp.lt.s32.totalorder %s214, 3
      %s216 = scalar_select %p215, %s214, 3
      %s217 = smul.addr %s216, 2
      %s218 = smul.addr %s217, 8
      %s219 = scalar_lea.vmem %s3, %s218
      %s220 = smul.u32 2, %s15
      %s221 = smul.u32 2, %s15
      %p222 = scmp.lt.s32.totalorder %s221, 3
      %s223 = scalar_select %p222, %s221, 3
      %s224 = smul.addr %s223, 2
      %s225 = smul.addr %s224, 8
      %s226 = scalar_lea.vmem %s4, %s225
      %s227 = smul.u32 2, %s15
      %v228 = vld [vmem:[%s212] sm:$0xff]
      %v229 = vld [vmem:[%s212 + $0x8] sm:$0xff]
      %v230 = vround.ne.pseudo %v228
      %v231 = vround.ne.pseudo %v229
      %v232 = vld [vmem:[%s1] sm:$0xff]
      %v233 = vld [vmem:[%s1 + $0x8] sm:$0xff]
      %v234 = vld [vmem:[%s1 + $0x10] sm:$0xff]
      %v235 = vld [vmem:[%s1 + $0x18] sm:$0xff]
      %v236 = vld [vmem:[%s1 + $0x20] sm:$0xff]
      %v237 = vld [vmem:[%s1 + $0x28] sm:$0xff]
      %v238 = vld [vmem:[%s1 + $0x30] sm:$0xff]
      %v239 = vld [vmem:[%s1 + $0x38] sm:$0xff]
      %v240 = vld [vmem:[%s1 + $0x40] sm:$0xff]
      %v241 = vld [vmem:[%s1 + $0x48] sm:$0xff]
      %v242 = vld [vmem:[%s1 + $0x50] sm:$0xff]
      %v243 = vld [vmem:[%s1 + $0x58] sm:$0xff]
      %v244 = vld [vmem:[%s1 + $0x60] sm:$0xff]
      %v245 = vld [vmem:[%s1 + $0x68] sm:$0xff]
      %v246 = vld [vmem:[%s1 + $0x70] sm:$0xff]
      %v247 = vld [vmem:[%s1 + $0x78] sm:$0xff]
      %v248 = vld [vmem:[%s1 + $0x80] sm:$0xff]
      %v249 = vld [vmem:[%s1 + $0x88] sm:$0xff]
      %v250 = vld [vmem:[%s1 + $0x90] sm:$0xff]
      %v251 = vld [vmem:[%s1 + $0x98] sm:$0xff]
      %v252 = vld [vmem:[%s1 + $0xa0] sm:$0xff]
      %v253 = vld [vmem:[%s1 + $0xa8] sm:$0xff]
      %v254 = vld [vmem:[%s1 + $0xb0] sm:$0xff]
      %v255 = vld [vmem:[%s1 + $0xb8] sm:$0xff]
      %v256 = vld [vmem:[%s1 + $0xc0] sm:$0xff]
      %v257 = vld [vmem:[%s1 + $0xc8] sm:$0xff]
      %v258 = vld [vmem:[%s1 + $0xd0] sm:$0xff]
      %v259 = vld [vmem:[%s1 + $0xd8] sm:$0xff]
      %v260 = vld [vmem:[%s1 + $0xe0] sm:$0xff]
      %v261 = vld [vmem:[%s1 + $0xe8] sm:$0xff]
      %v262 = vld [vmem:[%s1 + $0xf0] sm:$0xff]
      %v263 = vld [vmem:[%s1 + $0xf8] sm:$0xff]
      %v264 = vld [vmem:[%s2] sm:$0x3]
      %v266 = vlaneseq
      %v267 = vshrl.u32 %v266, 7
      %v268 = vsub.s32 0, %v267
      %v269 = vrot.slane %v264, %v268
      %v270 = vlaneseq
      %v271 = vshrl.u32 %v270, 7
      %v272 = vsub.s32 1, %v271
      %v273 = vrot.slane %v264, %v272
      %276 = vmatprep.subr.mxu0 %v233
      %277 = vmatpush1.msra.mxu0 %v232
      %278 = vmatprep.subr.mxu0 %v235
      %279 = vmatpush1.msra.mxu0 %v234
      %280 = vmatprep.subr.mxu0 %v237
      %281 = vmatpush1.msra.mxu0 %v236
      %282 = vmatprep.subr.mxu0 %v239
      %283 = vmatpush1.msra.mxu0 %v238
      %284 = vmatprep.subr.mxu0 %v241
      %285 = vmatpush1.msra.mxu0 %v240
      %286 = vmatprep.subr.mxu0 %v243
      %287 = vmatpush1.msra.mxu0 %v242
      %288 = vmatprep.subr.mxu0 %v245
      %289 = vmatpush1.msra.mxu0 %v244
      %290 = vmatprep.subr.mxu0 %v247
      %291 = vmatpush1.msra.mxu0 %v246
      %292 = vmatprep.subr.mxu0 %v249
      %293 = vmatpush1.msra.mxu0 %v248
      %294 = vmatprep.subr.mxu0 %v251
      %295 = vmatpush1.msra.mxu0 %v250
      %296 = vmatprep.subr.mxu0 %v253
      %297 = vmatpush1.msra.mxu0 %v252
      %298 = vmatprep.subr.mxu0 %v255
      %299 = vmatpush1.msra.mxu0 %v254
      %300 = vmatprep.subr.mxu0 %v257
      %301 = vmatpush1.msra.mxu0 %v256
      %302 = vmatprep.subr.mxu0 %v259
      %303 = vmatpush1.msra.mxu0 %v258
      %304 = vmatprep.subr.mxu0 %v261
      %305 = vmatpush1.msra.mxu0 %v260
      %306 = vmatprep.subr.mxu0 %v263
      %307 = vmatpush1.msra.mxu0 %v262
      %308 = vmatprep.subr.mxu0 0.0
      %309 = vmatpush1.msra.mxu0 0.0
      %310 = vmatprep.subr.mxu0 0.0
      %311 = vmatpush1.msra.mxu0 0.0
      %312 = vmatprep.subr.mxu0 0.0
      %313 = vmatpush1.msra.mxu0 0.0
      %314 = vmatprep.subr.mxu0 0.0
      %315 = vmatpush1.msra.mxu0 0.0
      %316 = vmatprep.subr.mxu0 0.0
      %317 = vmatpush1.msra.mxu0 0.0
      %318 = vmatprep.subr.mxu0 0.0
      %319 = vmatpush1.msra.mxu0 0.0
      %320 = vmatprep.subr.mxu0 0.0
      %321 = vmatpush1.msra.mxu0 0.0
      %322 = vmatprep.subr.mxu0 0.0
      %323 = vmatpush1.msra.mxu0 0.0
      %324 = vmatprep.subr.mxu0 0.0
      %325 = vmatpush1.msra.mxu0 0.0
      %326 = vmatprep.subr.mxu0 0.0
      %327 = vmatpush1.msra.mxu0 0.0
      %328 = vmatprep.subr.mxu0 0.0
      %329 = vmatpush1.msra.mxu0 0.0
      %330 = vmatprep.subr.mxu0 0.0
      %331 = vmatpush1.msra.mxu0 0.0
      %332 = vmatprep.subr.mxu0 0.0
      %333 = vmatpush1.msra.mxu0 0.0
      %334 = vmatprep.subr.mxu0 0.0
      %335 = vmatpush1.msra.mxu0 0.0
      %336 = vmatprep.subr.mxu0 0.0
      %337 = vmatpush1.msra.mxu0 0.0
      %338 = vmatprep.subr.mxu0 0.0
      %339 = vmatpush1.msra.mxu0 0.0
      %340 = vmatprep.mubr.f32.mxu0 0.0
      %341 = vmatmul.mubr.f32.gmra.mrb[0].mxu0 %v230
      %v342 = vpop.f32.mrb[0].mxu0
      %v343 = vadd.f32 %v269, %v342
      %v344 = vpop.f32.mrb[0].mxu0
      %v345 = vadd.f32 %v273, %v344
      %346 = vmatprep.mubr.f32.mxu0 0.0
      %347 = vmatmul.mubr.f32.gmra.mrb[0].mxu0 %v231
      %v348 = vpop.f32.mrb[0].mxu0
      %v349 = vadd.f32 %v269, %v348
      %v350 = vpop.f32.mrb[0].mxu0
      %v351 = vadd.f32 %v273, %v350
      %352 = vdwg.mxu0
      %v353 = vtanh.pop %v343
      %v354 = vtanh.pop %v345
      %v355 = vtanh.pop %v349
      %v356 = vtanh.pop %v351
      %v357 = vmax.f32 %v353, -0.9
      %v358 = vmax.f32 %v354, -0.9
      %v359 = vmax.f32 %v355, -0.9
      %v360 = vmax.f32 %v356, -0.9
      %v361 = vmin.f32 %v357, 0.9
      %v362 = vmin.f32 %v358, 0.9
      %v363 = vmin.f32 %v359, 0.9
      %v364 = vmin.f32 %v360, 0.9
      %v365 = vld [vmem:[%s219] sm:$0xff]
      %v366 = vld [vmem:[%s219 + $0x8] sm:$0xff]
      %v367 = vld [vmem:[%s219 + $0x10] sm:$0xff]
      %v368 = vld [vmem:[%s219 + $0x18] sm:$0xff]
      %v369 = vadd.f32 %v361, %v365
      %v370 = vadd.f32 %v362, %v366
      %v371 = vadd.f32 %v363, %v367
      %v372 = vadd.f32 %v364, %v368
      %373 = vst [vmem:[%s226] sm:$0xff] %v369
      %374 = vst [vmem:[%s226 + $0x8] sm:$0xff] %v370
      %375 = vst [vmem:[%s226 + $0x10] sm:$0xff] %v371
      %376 = vst [vmem:[%s226 + $0x18] sm:$0xff] %v372
      %s377 = smul.u32 2, %s15
      %p378 = scmp.lt.s32.totalorder %s377, 3
      %s379 = scalar_select %p378, %s377, 3
      %s380 = smul.addr %s379, 2
      %s381 = smul.addr %s380, 8
      %s382 = scalar_lea.vmem %s4, %s381
      // Predicated region
      $region37: #{fused_decoder_forward.1} parent=35 // pred_check
        %p383 = pneg %p127
      $region38: #{fused_decoder_forward.1} parent=35 // pred_check_branch
        %385 = sbr.rel (%p383) target = $region40
      $region39: #{fused_decoder_forward.1} parent=35 // pred_region
        %s386 = smul.u32 2, %s15
      $region40: #{fused_decoder_forward.1} parent=35 // pred_fallthru
        _
    $region36: #{fused_decoder_forward.1} parent=5 // pred_fallthru
      _
    %p387 = scmp.le.s32.totalorder 2, %s10
    // Predicated region
    $region41: #{fused_decoder_forward.1} parent=5 // pred_check
      %p388 = pneg %p387
    $region42: #{fused_decoder_forward.1} parent=5 // pred_check_branch
      %390 = sbr.rel (%p388) target = $region44
    $region43: #{fused_decoder_forward.1} parent=5 // pred_region
      %s391 = ssub.s32 %s10, 2
      // Predicated region
      $region45: #{fused_decoder_forward.1} parent=43 // pred_check
        %p392 = pneg %p133
      $region46: #{fused_decoder_forward.1} parent=43 // pred_check_branch
        %394 = sbr.rel (%p392) target = $region48
      $region47: #{fused_decoder_forward.1} parent=43 // pred_region
        %s395 = smul.u32 2, %s16
        %p396 = scmp.lt.s32.totalorder %s395, 3
        %s397 = scalar_select %p396, %s395, 3
        %s398 = smul.addr %s397, 2
        %s399 = smul.addr %s398, 8
        %s400 = scalar_lea.vmem %s4, %s399
      $region48: #{fused_decoder_forward.1} parent=43 // pred_fallthru
        _
    $region44: #{fused_decoder_forward.1} parent=5 // pred_fallthru
      _
  $region6: #{fused_decoder_forward.1} parent=0 // loop_footer
    %s14 = sadd.s32 1, %s10
  $region7: #{fused_decoder_forward.1} parent=0 // loop_footer_branch
    %9 = sbr.rel target = $region3
  $region8: #{fused_decoder_forward.1} parent=0 // loop_exit
    _

</llo_original>
